<compile_context>
chip_gen: v5e
topology: v5e:2x2
jax: 0.10.0
libtpu: 0.0.40
codegen_flags: <defaults>
</compile_context>

<pallas_src>
import functools

import jax
import jax.numpy as jnp
from jax.experimental import pallas as pl
from jax.experimental.pallas import tpu as pltpu


def _rica_matmul_kernel(w_ref, x_ref, out_ref, acc_ref):
    """One (tm, tn) output tile, accumulated over the K grid axis."""
    @pl.when(pl.program_id(2) == 0)
    def _():
        acc_ref[...] = jnp.zeros_like(acc_ref)

    acc_ref[...] += jnp.dot(
        w_ref[...], x_ref[...], preferred_element_type=jnp.float32
    )

    @pl.when(pl.program_id(2) == pl.num_programs(2) - 1)
    def _():
        out_ref[...] = acc_ref[...].astype(out_ref.dtype)


def _round_up(v: int, m: int) -> int:
    return ((v + m - 1) // m) * m


@functools.partial(
    jax.jit, static_argnames=("compute_dtype", "tm", "tn", "tk")
)
def rica_forward(weight, x, *, compute_dtype=jnp.bfloat16,
                 tm=256, tn=256, tk=512):
    """latent = weight @ x via a tiled Pallas TPU kernel.

    weight: (n_clusters, input_dim)
    x:      (input_dim, batch)
    Returns latent with shape (n_clusters, batch), float32.
    The `transform` side product of the PyTorch module is just latent.T;
    callers that need it should transpose lazily (kept out of the hot path).
    """
    M, K = weight.shape
    K2, N = x.shape
    assert K == K2, "input_dim mismatch between weight and x"

    # Clamp tiles for small problems, keeping TPU-friendly granularity:
    # sublane multiple (8) on M, lane multiple (128) on K and N.
    tm = min(tm, _round_up(M, 8))
    tn = min(tn, _round_up(N, 128))
    tk = min(tk, _round_up(K, 128))

    Mp = _round_up(M, tm)
    Np = _round_up(N, tn)
    Kp = _round_up(K, tk)

    # bf16 MXU inputs, f32 accumulate. Zero-padding is exact for the matmul.
    w = weight.astype(compute_dtype)
    xx = x.astype(compute_dtype)
    if (Mp, Kp) != (M, K):
        w = jnp.pad(w, ((0, Mp - M), (0, Kp - K)))
    if (Kp, Np) != (K, N):
        xx = jnp.pad(xx, ((0, Kp - K), (0, Np - N)))

    grid = (Mp // tm, Np // tn, Kp // tk)

    in_itemsize = jnp.dtype(compute_dtype).itemsize
    cost = pl.CostEstimate(
        flops=2 * Mp * Np * Kp,
        transcendentals=0,
        bytes_accessed=(Mp * Kp + Kp * Np) * in_itemsize + Mp * Np * 4,
    )

    latent_padded = pl.pallas_call(
        _rica_matmul_kernel,
        out_shape=jax.ShapeDtypeStruct((Mp, Np), jnp.float32),
        grid_spec=pltpu.PrefetchScalarGridSpec(
            num_scalar_prefetch=0,
            grid=grid,
            in_specs=[
                pl.BlockSpec((tm, tk), lambda i, j, k: (i, k)),
                pl.BlockSpec((tk, tn), lambda i, j, k: (k, j)),
            ],
            out_specs=pl.BlockSpec((tm, tn), lambda i, j, k: (i, j)),
            scratch_shapes=[pltpu.VMEM((tm, tn), jnp.float32)],
        ),
        compiler_params=pltpu.CompilerParams(
            dimension_semantics=("parallel", "parallel", "arbitrary"),
            vmem_limit_bytes=48 * 1024 * 1024,
        ),
        cost_estimate=cost,
    )(w, xx)

    return latent_padded[:M, :N]


def rica_loss(weight, x, penalty=0.1):
    """loss_function equivalent, reusing the kernel's latent.

    Note: at memory-bound sizes the reconstruction term could be fused into
    the kernel epilogue (second matmul on the resident latent tile plus an L1
    reduction) to avoid a second HBM pass; kept in plain JAX here for clarity.
    """
    latent = rica_forward(weight, x)
    reconstruction = 0.5 * jnp.sum((weight.T @ latent - x) ** 2)
    latent_loss = penalty * jnp.sum(jnp.abs(latent))
    return reconstruction + latent_loss


if __name__ == "__main__":
    # Small deterministic problem consistent with the module:
    # input_dim=32, n_clusters=8, batch=16.
    input_dim, n_clusters, batch = 32, 8, 16

    key = jax.random.PRNGKey(0)
    k_w, k_x = jax.random.split(key)
    weight = jax.random.normal(k_w, (n_clusters, input_dim), dtype=jnp.float32)
    x = jax.random.normal(k_x, (input_dim, batch), dtype=jnp.float32)

    latent = rica_forward(weight, x)
    jax.block_until_ready(latent)

    # `self.transform = latent.t()` in PyTorch -> lazy transpose by the caller.
    transform = latent.T

    # Reference with identical input rounding (bf16 inputs, f32 accumulate).
    w_r = weight.astype(jnp.bfloat16).astype(jnp.float32)
    x_r = x.astype(jnp.bfloat16).astype(jnp.float32)
    ref_bf16 = w_r @ x_r
    # Full-precision reference (loose tolerance accounts for bf16 rounding).
    ref_f32 = weight @ x

    assert latent.shape == (n_clusters, batch)
    assert transform.shape == (batch, n_clusters)
    assert jnp.allclose(latent, ref_bf16, atol=1e-3, rtol=1e-3), (
        "kernel mismatch vs bf16-rounded reference")
    assert jnp.allclose(latent, ref_f32, atol=2.5e-1, rtol=1e-1), (
        "kernel mismatch vs f32 reference")
    assert jnp.allclose(transform, ref_bf16.T, atol=1e-3, rtol=1e-3)

    # Exercise the loss path once as well.
    loss = rica_loss(weight, x)
    jax.block_until_ready(loss)
    assert jnp.isfinite(loss)

    print("KERNEL_OK")
</pallas_src>

<mosaic_0001>
module attributes {stable_mosaic.version = 11 : i64} {
  func.func @_rica_matmul_kernel(%arg0: i32, %arg1: i32, %arg2: i32, %arg3: memref<8x128xbf16, #tpu.memory_space<vmem>>, %arg4: memref<128x128xbf16, #tpu.memory_space<vmem>>, %arg5: memref<8x128xf32, #tpu.memory_space<vmem>>, %arg6: memref<8x128xf32, #tpu.memory_space<vmem>>) attributes {dimension_semantics = [#tpu.dimension_semantics<parallel>, #tpu.dimension_semantics<parallel>, #tpu.dimension_semantics<arbitrary>], iteration_bounds = array<i64: 1, 1, 1>, scalar_prefetch = 0 : i64, scratch_operands = 1 : i64, tpu.core_type = #tpu.core_type<tc>, window_params = [{transform_indices = @transform_0, window_bounds = array<i64: 8, 128>}, {transform_indices = @transform_1, window_bounds = array<i64: 128, 128>}, {transform_indices = @transform_2, window_bounds = array<i64: 8, 128>}]} {
    %c0_i32 = arith.constant 0 : i32
    %0 = arith.cmpi eq, %arg2, %c0_i32 : i32
    %1 = arith.extui %0 : i1 to i32
    %c0_i32_0 = arith.constant 0 : i32
    %2 = arith.cmpi ne, %1, %c0_i32_0 : i32
    scf.if %2 {
      %cst_10 = arith.constant 0.000000e+00 : f32
      %12 = vector.broadcast %cst_10 : f32 to vector<8x128xf32>
      %c0_11 = arith.constant 0 : index
      %c0_12 = arith.constant 0 : index
      %13 = vector.load %arg6[%c0_11, %c0_12] : memref<8x128xf32, #tpu.memory_space<vmem>>, vector<8x128xf32>
      tpu.vector_store %arg6[%c0_11, %c0_12], %12 {strides = array<i32>} : memref<8x128xf32, #tpu.memory_space<vmem>>, vector<8x128xf32>,
    } else {
    }
    %c0 = arith.constant 0 : index
    %c0_1 = arith.constant 0 : index
    %3 = vector.load %arg6[%c0, %c0_1] : memref<8x128xf32, #tpu.memory_space<vmem>>, vector<8x128xf32>
    %c0_2 = arith.constant 0 : index
    %c0_3 = arith.constant 0 : index
    %4 = vector.load %arg3[%c0_2, %c0_3] : memref<8x128xbf16, #tpu.memory_space<vmem>>, vector<8x128xbf16>
    %c0_4 = arith.constant 0 : index
    %c0_5 = arith.constant 0 : index
    %5 = vector.load %arg4[%c0_4, %c0_5] : memref<128x128xbf16, #tpu.memory_space<vmem>>, vector<128x128xbf16>
    %cst = arith.constant dense<0.000000e+00> : vector<8x128xf32>
    %6 = tpu.matmul %4, %5, %cst {dimension_numbers = #tpu.dot_dimension_numbers<[1], [0], [0], [1], [0, 0, 1, 1], [], []>} : vector<8x128xbf16>, vector<128x128xbf16>, vector<8x128xf32> -> vector<8x128xf32>
    %7 = arith.addf %3, %6 : vector<8x128xf32>
    %c0_6 = arith.constant 0 : index
    %c0_7 = arith.constant 0 : index
    %8 = vector.load %arg6[%c0_6, %c0_7] : memref<8x128xf32, #tpu.memory_space<vmem>>, vector<8x128xf32>
    tpu.vector_store %arg6[%c0_6, %c0_7], %7 {strides = array<i32>} : memref<8x128xf32, #tpu.memory_space<vmem>>, vector<8x128xf32>,
    %c0_i32_8 = arith.constant 0 : i32
    %9 = arith.cmpi eq, %arg2, %c0_i32_8 : i32
    %10 = arith.extui %9 : i1 to i32
    %c0_i32_9 = arith.constant 0 : i32
    %11 = arith.cmpi ne, %10, %c0_i32_9 : i32
    scf.if %11 {
      %c0_10 = arith.constant 0 : index
      %c0_11 = arith.constant 0 : index
      %12 = vector.load %arg6[%c0_10, %c0_11] : memref<8x128xf32, #tpu.memory_space<vmem>>, vector<8x128xf32>
      %c0_12 = arith.constant 0 : index
      %c0_13 = arith.constant 0 : index
      %13 = vector.load %arg5[%c0_12, %c0_13] : memref<8x128xf32, #tpu.memory_space<vmem>>, vector<8x128xf32>
      tpu.vector_store %arg5[%c0_12, %c0_13], %12 {strides = array<i32>} : memref<8x128xf32, #tpu.memory_space<vmem>>, vector<8x128xf32>,
    } else {
    }
    return
  }
  func.func @transform_0(%arg0: i32, %arg1: i32, %arg2: i32) -> (i32, i32) {
    %c0_i32 = arith.constant 0 : i32
    return %arg0, %arg2 : i32, i32
  }
  func.func @transform_1(%arg0: i32, %arg1: i32, %arg2: i32) -> (i32, i32) {
    %c0_i32 = arith.constant 0 : i32
    return %arg2, %arg1 : i32, i32
  }
  func.func @transform_2(%arg0: i32, %arg1: i32, %arg2: i32) -> (i32, i32) {
    %c0_i32 = arith.constant 0 : i32
    return %arg0, %arg1 : i32, i32
  }
}

</mosaic_0001>

<llo_original>
// kernel: rica_forward.1
$region0: #{rica_forward.1}
  #allocation0 [shape = 'u32[]', space=smem, size = 0x4, offset = 0x4, fixed_abs, tag = 'smem constant byte address 0x4 - core index']
  #allocation1 [shape = 'u32[72,128]{1,0:T(1,128)}', space=vmem, size = 0x9000, scoped, tag = 'internal scratch']
  #allocation2 [shape = 'f32[8,128]{1,0:T(8,128)}', space=vmem, size = 0x1000, scoped, tag = 'scratch operand']
  %s0 = inlined_call_operand.vmem [shape: bf16[8,128], index: 0, kind: input, shape index: {}]
  %s1 = inlined_call_operand.vmem [shape: bf16[128,128], index: 1, kind: input, shape index: {}]
  %s2 = inlined_call_operand.hbm [shape: f32[8,128], index: 2, kind: output, shape index: {}]
  %s3 = sld [smem:[#allocation0]]
  $region26: #{rica_forward.1} parent=0
    _
  %s5 = ssub.s32 1, %s3
  %s6 = scalar_select 0, %s5, %s3
  $region1: #{rica_forward.1} parent=0
    #allocation3 [shape = 'u8[4096]{0}', space=vmem, size = 0x1000, scoped, tag = 'output window, operand 0, single buffered']
    #allocation4 [shape = 's32[1]{0}', space=sflag, size = 0x4, scoped, tag = 'scoped memory for rica_forward.1']
    %7 = vsyncpa [#allocation4], 0
    // Predicated region
    $region2: #{rica_forward.1} parent=1 // pred_check
      _
    $region3: #{rica_forward.1} parent=1 // pred_check_branch
      %9 = sbr.rel (0) target = $region5
    $region4: #{rica_forward.1} parent=1 // pred_region
      _
    $region5: #{rica_forward.1} parent=1 // pred_fallthru
      _
    // Predicated region
    $region6: #{rica_forward.1} parent=1 // pred_check
      _
    $region7: #{rica_forward.1} parent=1 // pred_check_branch
      %11 = sbr.rel (0) target = $region9
    $region8: #{rica_forward.1} parent=1 // pred_region
      _
    $region9: #{rica_forward.1} parent=1 // pred_fallthru
      _
    %p12 = scmp.eq.s32.totalorder 0, 0
    // Predicated region
    $region10: #{rica_forward.1} parent=1 // pred_check
      %p13 = pneg %p12
    $region11: #{rica_forward.1} parent=1 // pred_check_branch
      %15 = sbr.rel (%p13) target = $region13
    $region12: #{rica_forward.1} parent=1 // pred_region
      %16 = vst [vmem:[#allocation2] sm:$0xff] 0.0
    $region13: #{rica_forward.1} parent=1 // pred_fallthru
      _
    %v17 = vld [vmem:[#allocation2] sm:$0xff]
    %v18 = vld [vmem:[%s0] sm:$0xf]
    %v19 = vld [vmem:[%s1] sm:$0xf]
    %v20 = vld [vmem:[%s1 + $0x4] sm:$0xf]
    %v21 = vld [vmem:[%s1 + $0x8] sm:$0xf]
    %v22 = vld [vmem:[%s1 + $0xc] sm:$0xf]
    %v23 = vld [vmem:[%s1 + $0x10] sm:$0xf]
    %v24 = vld [vmem:[%s1 + $0x14] sm:$0xf]
    %v25 = vld [vmem:[%s1 + $0x18] sm:$0xf]
    %v26 = vld [vmem:[%s1 + $0x1c] sm:$0xf]
    %v27 = vld [vmem:[%s1 + $0x20] sm:$0xf]
    %v28 = vld [vmem:[%s1 + $0x24] sm:$0xf]
    %v29 = vld [vmem:[%s1 + $0x28] sm:$0xf]
    %v30 = vld [vmem:[%s1 + $0x2c] sm:$0xf]
    %v31 = vld [vmem:[%s1 + $0x30] sm:$0xf]
    %v32 = vld [vmem:[%s1 + $0x34] sm:$0xf]
    %v33 = vld [vmem:[%s1 + $0x38] sm:$0xf]
    %v34 = vld [vmem:[%s1 + $0x3c] sm:$0xf]
    %v51 = vunpack.c.l.b16 %v19
    %v52 = vunpack.c.l.b16 %v20
    %v53 = vunpack.c.l.b16 %v21
    %v54 = vunpack.c.l.b16 %v22
    %v55 = vunpack.c.l.b16 %v23
    %v56 = vunpack.c.l.b16 %v24
    %v57 = vunpack.c.l.b16 %v25
    %v58 = vunpack.c.l.b16 %v26
    %v59 = vunpack.c.l.b16 %v27
    %v60 = vunpack.c.l.b16 %v28
    %v61 = vunpack.c.l.b16 %v29
    %v62 = vunpack.c.l.b16 %v30
    %v63 = vunpack.c.l.b16 %v31
    %v64 = vunpack.c.l.b16 %v32
    %v65 = vunpack.c.l.b16 %v33
    %v66 = vunpack.c.l.b16 %v34
    %v67 = vpack.c.b16 %v52, %v51
    %v68 = vpack.c.b16 %v54, %v53
    %v69 = vpack.c.b16 %v56, %v55
    %v70 = vpack.c.b16 %v58, %v57
    %v71 = vpack.c.b16 %v60, %v59
    %v72 = vpack.c.b16 %v62, %v61
    %v73 = vpack.c.b16 %v64, %v63
    %v74 = vpack.c.b16 %v66, %v65
    %83 = vmatpush.bf16.msra.mxu0 %v74
    %84 = vmatpush.bf16.msra.mxu0 %v73
    %85 = vmatpush.bf16.msra.mxu0 %v72
    %86 = vmatpush.bf16.msra.mxu0 %v71
    %87 = vmatpush.bf16.msra.mxu0 %v70
    %88 = vmatpush.bf16.msra.mxu0 %v69
    %89 = vmatpush.bf16.msra.mxu0 %v68
    %90 = vmatpush.bf16.msra.mxu0 %v67
    %91 = vmatmul.bf16.gmra.mxu0 %v18
    %v92 = vpop.f32.mrf.mxu0
    %v93 = vadd.f32 0.0, %v92
    %v94 = vpop.f32.mrf.mxu0
    %95 = vdwg.mxu0
    %v96 = vadd.f32 %v17, %v93
    %97 = vst [vmem:[#allocation2] sm:$0xff] %v96
    // Predicated region
    $region14: #{rica_forward.1} parent=1 // pred_check
      %p98 = pneg %p12
    $region15: #{rica_forward.1} parent=1 // pred_check_branch
      %100 = sbr.rel (%p98) target = $region17
    $region16: #{rica_forward.1} parent=1 // pred_region
      %v101 = vld [vmem:[#allocation2] sm:$0xff]
      %102 = vst [vmem:[#allocation3] sm:$0xff] %v101
    $region17: #{rica_forward.1} parent=1 // pred_fallthru
      _
    // Predicated region
    $region18: #{rica_forward.1} parent=1 // pred_check
      _
    $region19: #{rica_forward.1} parent=1 // pred_check_branch
      %104 = sbr.rel (0) target = $region21
    $region20: #{rica_forward.1} parent=1 // pred_region
      %106 = vsyncadd [#allocation4], 0
      %s108 = sshll.u32 [#allocation3], 4
      %s109 = int_to_ptr.vmem [resolvable:$true] %s108
      %s110 = sshll.u32 %s2, 4
      %s111 = int_to_ptr.hbm [resolvable:$true] %s110
      %113 = dma.vmem_to_hbm [thread:$0]  %s109, 128, %s111, [#allocation4]
    $region21: #{rica_forward.1} parent=1 // pred_fallthru
      _
    // Predicated region
    $region22: #{rica_forward.1} parent=1 // pred_check
      _
    $region23: #{rica_forward.1} parent=1 // pred_check_branch
      %115 = sbr.rel (0) target = $region25
    $region24: #{rica_forward.1} parent=1 // pred_region
      %117 = dma.done [#allocation4], 128
    $region25: #{rica_forward.1} parent=1 // pred_fallthru
      _
    %118 = vsyncpa [#allocation4], 1

</llo_original>
